<compile_context>
chip_gen: v7x
topology: tpu7x:2x2x1
jax: 0.10.0
libtpu: 0.0.40
codegen_flags: <defaults>
</compile_context>

<pallas_src>
import functools

import jax
import jax.numpy as jnp
from jax import lax
from jax.experimental import pallas as pl
from jax.experimental.pallas import tpu as pltpu


def _round_up(x, m):
    return (x + m - 1) // m * m


def _neuro_style_loss_kernel(logits_ref, labels_ref, out_ref, *,
                             total_rows, block_rows):
    """Per-tile partial reduction.

    Writes (ce_sum, sarcasm_sum, humor_sum) of this batch tile into lanes 0..2 of
    sublane 0 of its own (1, 8, 128) output block — no cross-step state, so the
    grid axis is safely 'parallel' (dual-TC on v7x).
    """
    pid = pl.program_id(0)
    nprog = pl.num_programs(0)
    rem = total_rows % block_rows          # python-static

    def compute(mask_rows):
        logits = logits_ref[...].astype(jnp.float32)      # (TB, C) f32 compute on-chip
        labels = labels_ref[...]                          # (TB, 1) int32
        TB, C = logits.shape

        if mask_rows:
            # Only emitted for the (possibly) ragged last tile.
            row = pid * TB + lax.broadcasted_iota(jnp.int32, (TB, 1), 0)
            valid = row < total_rows
            valid_f = valid.astype(jnp.float32)           # (TB, 1)
            logits = jnp.where(valid, logits, 0.0)        # keep exp() finite on pad rows

        col = lax.broadcasted_iota(jnp.int32, (TB, C), 1)

        # ---- shared softmax pieces (stable) --------------------------------
        m = jnp.max(logits, axis=-1, keepdims=True)       # (TB, 1)
        shifted = logits - m                              # max(shifted) == 0 exactly
        expv = jnp.exp(shifted)
        sumexp = jnp.sum(expv, axis=-1, keepdims=True)    # (TB, 1)
        log_sumexp = jnp.log(sumexp)                      # (TB, 1)
        inv_sumexp = pl.reciprocal(sumexp, approx=True)   # EUP; only touches proxies

        # ---- cross entropy: lse - picked (no materialized one-hot) ---------
        picked_shifted = jnp.sum(jnp.where(col == labels, shifted, 0.0),
                                 axis=-1, keepdims=True)
        ce_rows = log_sumexp - picked_shifted             # (TB, 1)

        # ---- style scores ---------------------------------------------------
        # TODO(synk): _calculate_sarcasm / _calculate_humor bodies are `...` in the
        # reference module; deterministic softmax-based proxies are used:
        #   sarcasm = mean max softmax prob  (== 1/sumexp since max(shifted)==0)
        #   humor   = mean softmax entropy   (== log(sumexp) - sum(p*shifted))
        sarcasm_rows = inv_sumexp                                            # (TB, 1)
        humor_rows = log_sumexp - inv_sumexp * jnp.sum(expv * shifted,
                                                       axis=-1, keepdims=True)

        if mask_rows:
            ce_rows = ce_rows * valid_f
            sarcasm_rows = sarcasm_rows * valid_f
            humor_rows = humor_rows * valid_f

        ce_sum = jnp.sum(ce_rows, keepdims=True)          # (1, 1)
        sarcasm_sum = jnp.sum(sarcasm_rows, keepdims=True)
        humor_sum = jnp.sum(humor_rows, keepdims=True)

        # Lane-dense (8,128) partials tile: lanes 0..2 of sublane 0 are read back.
        lane = lax.broadcasted_iota(jnp.int32, (8, 128), 1)
        tile = jnp.where(lane == 0, ce_sum,
               jnp.where(lane == 1, sarcasm_sum,
               jnp.where(lane == 2, humor_sum, 0.0)))
        out_ref[0] = tile

    if rem == 0:
        # Batch divides evenly into tiles: never emit masking code at all.
        compute(mask_rows=False)
    else:
        @pl.when(pid == nprog - 1)
        def _ragged():
            compute(mask_rows=True)

        @pl.when(pid != nprog - 1)
        def _full():
            compute(mask_rows=False)


def neuro_style_loss(logits, labels, sarcasm_weight=0.6, humor_weight=0.4,
                     block_rows=None, vmem_budget_bytes=None):
    B, C = logits.shape
    itemsize = jnp.dtype(logits.dtype).itemsize

    # Per-generation VMEM sizing (v5e/v6e: 128 MiB, v7x: 64 MiB per TensorCore).
    try:
        vmem_cap = int(pltpu.get_tpu_info().vmem_capacity_bytes)
    except Exception:
        vmem_cap = 64 * 1024 * 1024
    vmem_limit = min((vmem_cap * 3) // 4, 96 * 1024 * 1024)
    if vmem_budget_bytes is None:
        vmem_budget_bytes = vmem_limit // 2

    # Bytes per batch row per step: double-buffered native-dtype input tile plus
    # ~4 f32-sized temporaries (f32 cast, shifted, expv, product) made in-kernel.
    bytes_per_row = C * (2 * itemsize + 16)
    if block_rows is None:
        tb = max(8, (vmem_budget_bytes // bytes_per_row) // 8 * 8)
        tb = min(tb, _round_up(B, 8))
    else:
        tb = min(_round_up(block_rows, 8), _round_up(B, 8))
    num_tiles = pl.cdiv(B, tb)

    labels2d = labels.reshape(B, 1).astype(jnp.int32)
    kernel = functools.partial(
        _neuro_style_loss_kernel,
        total_rows=int(B),
        block_rows=int(tb))

    partials = pl.pallas_call(
        kernel,
        out_shape=jax.ShapeDtypeStruct((num_tiles, 8, 128), jnp.float32),
        grid=(num_tiles,),
        in_specs=[
            pl.BlockSpec((tb, C), lambda i: (i, 0)),
            # TODO(synk): labels could be staged once (PrefetchScalarGridSpec) instead
            # of a tiny per-step (tb,1) DMA; negligible at these sizes.
            pl.BlockSpec((tb, 1), lambda i: (i, 0)),
        ],
        out_specs=pl.BlockSpec((1, 8, 128), lambda i: (i, 0, 0)),
        compiler_params=pltpu.CompilerParams(
            dimension_semantics=("parallel",),   # lets v7x shard tiles across both TCs
            vmem_limit_bytes=vmem_limit,
        ),
        # NOTE: no wrapper-side f32 cast — bf16 logits travel HBM->VMEM as bf16.
    )(logits, labels2d)

    # Tiny 3-scalar combine outside the kernel (parallel/dual-TC safe, also avoids
    # a long single-f32 running sum drifting for very large B).
    sums = jnp.sum(partials[:, 0, :3], axis=0)
    inv_n = 1.0 / float(B)
    ce = sums[0] * inv_n
    sarcasm = sums[1] * inv_n
    humor = sums[2] * inv_n
    style = sarcasm_weight * sarcasm + humor_weight * humor
    return ce + 0.3 * style


def _reference(logits, labels, sarcasm_weight=0.6, humor_weight=0.4):
    logits = logits.astype(jnp.float32)
    lse = jax.scipy.special.logsumexp(logits, axis=-1)
    picked = jnp.take_along_axis(logits, labels[:, None], axis=-1)[:, 0]
    ce = jnp.mean(lse - picked)
    probs = jax.nn.softmax(logits, axis=-1)
    logp = jax.nn.log_softmax(logits, axis=-1)
    sarcasm = jnp.mean(jnp.max(probs, axis=-1))
    humor = jnp.mean(-jnp.sum(probs * logp, axis=-1))
    return ce + 0.3 * (sarcasm_weight * sarcasm + humor_weight * humor)


if __name__ == "__main__":
    key = jax.random.PRNGKey(0)
    k_logits, k_labels = jax.random.split(key)
    B, C = 24, 128
    logits = jax.random.normal(k_logits, (B, C), dtype=jnp.float32)
    labels = jax.random.randint(k_labels, (B,), 0, C, dtype=jnp.int32)

    # 1) gridded path (3 parallel tiles of 8 rows), divisible batch -> unmasked fast path
    #    (approx reciprocal only perturbs the sarcasm/humor proxy terms; CE is exact)
    loss = jax.block_until_ready(neuro_style_loss(logits, labels, block_rows=8))
    ref = _reference(logits, labels)
    assert jnp.allclose(loss, ref, rtol=2e-3, atol=2e-3), (loss, ref)

    # 2) non-divisible batch exercises the pl.when-guarded padded-row masking
    B2 = 20
    loss2 = jax.block_until_ready(
        neuro_style_loss(logits[:B2], labels[:B2], block_rows=8))
    ref2 = _reference(logits[:B2], labels[:B2])
    assert jnp.allclose(loss2, ref2, rtol=2e-3, atol=2e-3), (loss2, ref2)

    # 3) bf16 ingest path with auto tile sizing (cast happens in-kernel)
    logits_bf16 = logits.astype(jnp.bfloat16)
    loss_bf16 = jax.block_until_ready(neuro_style_loss(logits_bf16, labels))
    ref_bf16 = _reference(logits_bf16, labels)
    assert jnp.allclose(loss_bf16, ref_bf16, rtol=2e-2, atol=2e-2), (loss_bf16, ref_bf16)

    print("KERNEL_OK")
</pallas_src>

<mosaic_0001>
module attributes {stable_mosaic.version = 11 : i64} {
  func.func @_neuro_style_loss_kernel(%arg0: i32, %arg1: memref<8x128xf32, #tpu.memory_space<vmem>>, %arg2: memref<8x1xi32, #tpu.memory_space<vmem>>, %arg3: memref<1x8x128xf32, #tpu.memory_space<vmem>>) attributes {dimension_semantics = [#tpu.dimension_semantics<parallel>], iteration_bounds = array<i64: 3>, scalar_prefetch = 0 : i64, scratch_operands = 0 : i64, tpu.core_type = #tpu.core_type<tc>, window_params = [{transform_indices = @transform_0, window_bounds = array<i64: 8, 128>}, {transform_indices = @transform_1, window_bounds = array<i64: 8, 1>}, {transform_indices = @transform_2, window_bounds = array<i64: 1, 8, 128>}]} {
    %c0 = arith.constant 0 : index
    %c0_0 = arith.constant 0 : index
    %0 = vector.load %arg1[%c0, %c0_0] : memref<8x128xf32, #tpu.memory_space<vmem>>, vector<8x128xf32>
    %c0_1 = arith.constant 0 : index
    %c0_2 = arith.constant 0 : index
    %1 = vector.load %arg2[%c0_1, %c0_2] : memref<8x1xi32, #tpu.memory_space<vmem>>, vector<8x1xi32>
    %2 = tpu.iota {dimensions = array<i32: 1>} : vector<8x128xi32>
    %cst = arith.constant dense<0xFF800000> : vector<8xf32>
    %3 = vector.multi_reduction <maximumf>, %0, %cst [1] : vector<8x128xf32> to vector<8xf32>
    %4 = vector.shape_cast %3 : vector<8xf32> to vector<8x1xf32>
    %5 = vector.broadcast %4 : vector<8x1xf32> to vector<8x128xf32>
    %6 = arith.subf %0, %5 : vector<8x128xf32>
    %7 = math.exp %6 : vector<8x128xf32>
    %cst_3 = arith.constant dense<0.000000e+00> : vector<8xf32>
    %8 = vector.multi_reduction <add>, %7, %cst_3 [1] : vector<8x128xf32> to vector<8xf32>
    %9 = vector.shape_cast %8 : vector<8xf32> to vector<8x1xf32>
    %10 = math.log %9 : vector<8x1xf32>
    %11 = tpu.reciprocal %9 {approx = true} : vector<8x1xf32> -> vector<8x1xf32>
    %12 = vector.broadcast %1 : vector<8x1xi32> to vector<8x128xi32>
    %13 = arith.cmpi eq, %2, %12 : vector<8x128xi32>
    %cst_4 = arith.constant 0.000000e+00 : f32
    %14 = vector.broadcast %cst_4 : f32 to vector<8x128xf32>
    %15 = arith.select %13, %6, %14 : vector<8x128xi1>, vector<8x128xf32>
    %cst_5 = arith.constant dense<0.000000e+00> : vector<8xf32>
    %16 = vector.multi_reduction <add>, %15, %cst_5 [1] : vector<8x128xf32> to vector<8xf32>
    %17 = vector.shape_cast %16 : vector<8xf32> to vector<8x1xf32>
    %18 = arith.subf %10, %17 : vector<8x1xf32>
    %19 = arith.mulf %7, %6 : vector<8x128xf32>
    %cst_6 = arith.constant dense<0.000000e+00> : vector<8xf32>
    %20 = vector.multi_reduction <add>, %19, %cst_6 [1] : vector<8x128xf32> to vector<8xf32>
    %21 = vector.shape_cast %20 : vector<8xf32> to vector<8x1xf32>
    %22 = arith.mulf %11, %21 : vector<8x1xf32>
    %23 = arith.subf %10, %22 : vector<8x1xf32>
    %24 = vector.shape_cast %18 : vector<8x1xf32> to vector<1x8x1xf32>
    %cst_7 = arith.constant dense<0.000000e+00> : vector<1xf32>
    %25 = vector.multi_reduction <add>, %24, %cst_7 [1, 2] : vector<1x8x1xf32> to vector<1xf32>
    %26 = vector.shape_cast %25 : vector<1xf32> to vector<1x1x1xf32>
    %27 = vector.extract %26[0, 0, 0] : f32 from vector<1x1x1xf32>
    %28 = vector.broadcast %27 : f32 to vector<1x1xf32>
    %29 = vector.shape_cast %11 : vector<8x1xf32> to vector<1x8x1xf32>
    %cst_8 = arith.constant dense<0.000000e+00> : vector<1xf32>
    %30 = vector.multi_reduction <add>, %29, %cst_8 [1, 2] : vector<1x8x1xf32> to vector<1xf32>
    %31 = vector.shape_cast %30 : vector<1xf32> to vector<1x1x1xf32>
    %32 = vector.extract %31[0, 0, 0] : f32 from vector<1x1x1xf32>
    %33 = vector.broadcast %32 : f32 to vector<1x1xf32>
    %34 = vector.shape_cast %23 : vector<8x1xf32> to vector<1x8x1xf32>
    %cst_9 = arith.constant dense<0.000000e+00> : vector<1xf32>
    %35 = vector.multi_reduction <add>, %34, %cst_9 [1, 2] : vector<1x8x1xf32> to vector<1xf32>
    %36 = vector.shape_cast %35 : vector<1xf32> to vector<1x1x1xf32>
    %37 = vector.extract %36[0, 0, 0] : f32 from vector<1x1x1xf32>
    %38 = vector.broadcast %37 : f32 to vector<1x1xf32>
    %39 = tpu.iota {dimensions = array<i32: 1>} : vector<8x128xi32>
    %c0_i32 = arith.constant 0 : i32
    %40 = vector.broadcast %c0_i32 : i32 to vector<8x128xi32>
    %41 = arith.cmpi eq, %39, %40 : vector<8x128xi32>
    %c1_i32 = arith.constant 1 : i32
    %42 = vector.broadcast %c1_i32 : i32 to vector<8x128xi32>
    %43 = arith.cmpi eq, %39, %42 : vector<8x128xi32>
    %c2_i32 = arith.constant 2 : i32
    %44 = vector.broadcast %c2_i32 : i32 to vector<8x128xi32>
    %45 = arith.cmpi eq, %39, %44 : vector<8x128xi32>
    %cst_10 = arith.constant 0.000000e+00 : f32
    %46 = vector.shape_cast %38 : vector<1x1xf32> to vector<1x1xf32>
    %47 = vector.broadcast %46 : vector<1x1xf32> to vector<8x128xf32>
    %48 = vector.broadcast %cst_10 : f32 to vector<8x128xf32>
    %49 = arith.select %45, %47, %48 : vector<8x128xi1>, vector<8x128xf32>
    %50 = vector.shape_cast %33 : vector<1x1xf32> to vector<1x1xf32>
    %51 = vector.broadcast %50 : vector<1x1xf32> to vector<8x128xf32>
    %52 = arith.select %43, %51, %49 : vector<8x128xi1>, vector<8x128xf32>
    %53 = vector.shape_cast %28 : vector<1x1xf32> to vector<1x1xf32>
    %54 = vector.broadcast %53 : vector<1x1xf32> to vector<8x128xf32>
    %55 = arith.select %41, %54, %52 : vector<8x128xi1>, vector<8x128xf32>
    %c0_11 = arith.constant 0 : index
    %c0_12 = arith.constant 0 : index
    %c0_13 = arith.constant 0 : index
    %56 = vector.load %arg3[%c0_11, %c0_12, %c0_13] : memref<1x8x128xf32, #tpu.memory_space<vmem>>, vector<1x8x128xf32>
    %57 = vector.shape_cast %56 : vector<1x8x128xf32> to vector<8x128xf32>
    %58 = vector.shape_cast %55 : vector<8x128xf32> to vector<1x8x128xf32>
    tpu.vector_store %arg3[%c0_11, %c0_12, %c0_13], %58 {strides = array<i32>} : memref<1x8x128xf32, #tpu.memory_space<vmem>>, vector<1x8x128xf32>,
    return
  }
  func.func @transform_0(%arg0: i32) -> (i32, i32) {
    %c0_i32 = arith.constant 0 : i32
    %c0_i32_0 = arith.constant 0 : i32
    return %arg0, %c0_i32 : i32, i32
  }
  func.func @transform_1(%arg0: i32) -> (i32, i32) {
    %c0_i32 = arith.constant 0 : i32
    %c0_i32_0 = arith.constant 0 : i32
    return %arg0, %c0_i32 : i32, i32
  }
  func.func @transform_2(%arg0: i32) -> (i32, i32, i32) {
    %c0_i32 = arith.constant 0 : i32
    %c0_i32_0 = arith.constant 0 : i32
    %c0_i32_1 = arith.constant 0 : i32
    return %arg0, %c0_i32, %c0_i32_0 : i32, i32, i32
  }
}

</mosaic_0001>

<llo_original>
// kernel: tpu_custom_call.1
$region0: #{tpu_custom_call.1}
  #allocation0 [shape = 'u32[]', space=smem, size = 0x4, offset = 0x4, fixed_abs, tag = 'smem constant byte address 0x4 - core index']
  #allocation1 [shape = 'u32[144,128]{1,0:T(1,128)}', space=vmem, size = 0x12000, scoped, tag = 'internal scratch']
  %s0 = inlined_call_operand.vmem [shape: f32[24,128], index: 0, kind: input, shape index: {}]
  %s1 = inlined_call_operand.vmem [shape: s32[24,1], index: 1, kind: input, shape index: {}]
  %s2 = inlined_call_operand.hbm [shape: f32[3,8,128], index: 2, kind: output, shape index: {}]
  %s3 = sld [smem:[#allocation0]]
  $region41: #{tpu_custom_call.1} parent=0
    _
  %s5 = ssub.s32 1, %s3
  %s6 = scalar_select 0, %s5, %s3
  $region1: #{tpu_custom_call.1} parent=0
    #allocation2 [shape = 'u8[8192]{0}', space=vmem, size = 0x2000, scoped, tag = 'output window, operand 0']
    #allocation3 [shape = 's32[2]{0}', space=sflag, size = 0x8, scoped, tag = 'scoped memory for tpu_custom_call.1']
    %7 = vsyncpa [#allocation3], 0
    %s8 = scalar_lea.sflag [#allocation3], 1
    %9 = vsyncpa %s8, 0
    loop: start=0, step=1, limit=5
    $region2: #{tpu_custom_call.1} parent=1 // loop_pre_header
      _
    $region3: #{tpu_custom_call.1} parent=1 // loop_header
      %s11 = sphi 0, %s15
      %p12 = scmp.ge.s32.totalorder %s11, 5
      %s21 = sphi 0, %s23
      %s24 = sphi 0, %s21
      %s25 = sphi 0, %s24
      %s41 = sphi 0, %s25
      %s47 = sphi 0, %s49
      %s50 = sphi 0, %s47
      %s51 = sphi 0, %s50
      %s67 = sphi 0, %s51
      %s73 = sphi 0, %s75
      %s76 = sphi 0, %s73
      %s77 = sphi 0, %s76
      %s93 = sphi 0, %s77
    $region4: #{tpu_custom_call.1} parent=1 // loop_header_branch
      %14 = sbr.rel (%p12) target = $region8
    $region5: #{tpu_custom_call.1} parent=1 // loop_body
      %s16 = ssub.s32 %s11, 1
      %s17 = ssub.s32 %s11, 2
      %s18 = sadd.s32 %s11, 1
      %s19 = ssub.s32 %s11, %s18
      %p20 = scmp.eq.s32.totalorder %s19, 0
      %s22 = sadd.s32 %s21, 1
      %s23 = scalar_select %p20, %s21, %s22
      %p26 = pneg %p20
      %p27 = scmp.eq.s32.totalorder %s11, 2
      %p28 = por %p26, %p27
      %p29 = scmp.ne.s32.totalorder %s21, %s24
      %p30 = scmp.eq.s32.totalorder %s11, 0
      %p31 = por %p29, %p30
      %p32 = scmp.ne.s32.totalorder %s21, %s24
      %p33 = scmp.eq.s32.totalorder %s16, 2
      %p34 = por %p32, %p33
      %p35 = scmp.ne.s32.totalorder %s24, %s25
      %p36 = scmp.eq.s32.totalorder %s16, 0
      %p37 = por %p35, %p36
      %p38 = scmp.ne.s32.totalorder %s24, %s25
      %p39 = scmp.eq.s32.totalorder %s17, 2
      %p40 = por %p38, %p39
      %p42 = scmp.ne.s32.totalorder %s25, %s41
      %p43 = scmp.eq.s32.totalorder %s17, 0
      %p44 = por %p42, %p43
      %s45 = ssub.s32 %s11, %s18
      %p46 = scmp.eq.s32.totalorder %s45, 0
      %s48 = sadd.s32 %s47, 1
      %s49 = scalar_select %p46, %s47, %s48
      %p52 = pneg %p46
      %p53 = scmp.eq.s32.totalorder %s11, 2
      %p54 = por %p52, %p53
      %p55 = scmp.ne.s32.totalorder %s47, %s50
      %p56 = scmp.eq.s32.totalorder %s11, 0
      %p57 = por %p55, %p56
      %p58 = scmp.ne.s32.totalorder %s47, %s50
      %p59 = scmp.eq.s32.totalorder %s16, 2
      %p60 = por %p58, %p59
      %p61 = scmp.ne.s32.totalorder %s50, %s51
      %p62 = scmp.eq.s32.totalorder %s16, 0
      %p63 = por %p61, %p62
      %p64 = scmp.ne.s32.totalorder %s50, %s51
      %p65 = scmp.eq.s32.totalorder %s17, 2
      %p66 = por %p64, %p65
      %p68 = scmp.ne.s32.totalorder %s51, %s67
      %p69 = scmp.eq.s32.totalorder %s17, 0
      %p70 = por %p68, %p69
      %s71 = ssub.s32 %s11, %s18
      %p72 = scmp.eq.s32.totalorder %s71, 0
      %s74 = sadd.s32 %s73, 1
      %s75 = scalar_select %p72, %s73, %s74
      %p78 = pneg %p72
      %p79 = scmp.eq.s32.totalorder %s11, 2
      %p80 = por %p78, %p79
      %p81 = scmp.ne.s32.totalorder %s73, %s76
      %p82 = scmp.eq.s32.totalorder %s11, 0
      %p83 = por %p81, %p82
      %p84 = scmp.ne.s32.totalorder %s73, %s76
      %p85 = scmp.eq.s32.totalorder %s16, 2
      %p86 = por %p84, %p85
      %p87 = scmp.ne.s32.totalorder %s76, %s77
      %p88 = scmp.eq.s32.totalorder %s16, 0
      %p89 = por %p87, %p88
      %p90 = scmp.ne.s32.totalorder %s76, %s77
      %p91 = scmp.eq.s32.totalorder %s17, 2
      %p92 = por %p90, %p91
      %p94 = scmp.ne.s32.totalorder %s77, %s93
      %p95 = scmp.eq.s32.totalorder %s17, 0
      %p96 = por %p94, %p95
      %p97 = scmp.le.s32.totalorder 1, %s11
      %p98 = scmp.lt.s32.totalorder %s11, 4
      %p99 = pnand %p97, %p98
      %p100 = pneg %p99
      // Predicated region
      $region9: #{tpu_custom_call.1} parent=5 // pred_check
        _
      $region10: #{tpu_custom_call.1} parent=5 // pred_check_branch
        %102 = sbr.rel (%p99) target = $region12
      $region11: #{tpu_custom_call.1} parent=5 // pred_region
        %s103 = ssub.s32 %s11, 1
      $region12: #{tpu_custom_call.1} parent=5 // pred_fallthru
        _
      %p104 = scmp.lt.s32.totalorder %s11, 3
      // Predicated region
      $region13: #{tpu_custom_call.1} parent=5 // pred_check
        %p105 = pneg %p104
      $region14: #{tpu_custom_call.1} parent=5 // pred_check_branch
        %107 = sbr.rel (%p105) target = $region16
      $region15: #{tpu_custom_call.1} parent=5 // pred_region
        // Predicated region
        $region17: #{tpu_custom_call.1} parent=15 // pred_check
          %p108 = pneg %p31
        $region18: #{tpu_custom_call.1} parent=15 // pred_check_branch
          %110 = sbr.rel (%p108) target = $region20
        $region19: #{tpu_custom_call.1} parent=15 // pred_region
          %p111 = scmp.lt.s32.totalorder %s11, 2
          %s112 = scalar_select %p111, %s11, 2
          %s113 = smul.addr %s112, 8
          %s114 = scalar_lea.vmem %s0, %s113
        $region20: #{tpu_custom_call.1} parent=15 // pred_fallthru
          _
        // Predicated region
        $region21: #{tpu_custom_call.1} parent=15 // pred_check
          %p115 = pneg %p57
        $region22: #{tpu_custom_call.1} parent=15 // pred_check_branch
          %117 = sbr.rel (%p115) target = $region24
        $region23: #{tpu_custom_call.1} parent=15 // pred_region
          %p118 = scmp.lt.s32.totalorder %s11, 2
          %s119 = scalar_select %p118, %s11, 2
          %s120 = smul.addr %s119, 8
          %s121 = scalar_lea.vmem %s1, %s120
        $region24: #{tpu_custom_call.1} parent=15 // pred_fallthru
          _
      $region16: #{tpu_custom_call.1} parent=5 // pred_fallthru
        _
      %p122 = scmp.le.s32.totalorder 1, %s11
      %p123 = scmp.lt.s32.totalorder %s11, 4
      %p124 = pnand %p122, %p123
      %p125 = pneg %p124
      // Predicated region
      $region25: #{tpu_custom_call.1} parent=5 // pred_check
        _
      $region26: #{tpu_custom_call.1} parent=5 // pred_check_branch
        %127 = sbr.rel (%p124) target = $region28
      $region27: #{tpu_custom_call.1} parent=5 // pred_region
        %s128 = ssub.s32 %s11, 1
        %p129 = scmp.lt.s32.totalorder %s16, 2
        %s130 = scalar_select %p129, %s16, 2
        %s131 = smul.addr %s130, 8
        %s132 = scalar_lea.vmem %s0, %s131
        %p133 = pneg %p37
        %p134 = pneg %p34
        %p135 = scmp.lt.s32.totalorder %s16, 2
        %s136 = scalar_select %p135, %s16, 2
        %s137 = smul.addr %s136, 8
        %s138 = scalar_lea.vmem %s1, %s137
        %p139 = pneg %p63
        %p140 = pneg %p60
        %p141 = pneg %p89
        %p142 = pneg %p86
        %s143 = sand.u32 %s76, 1
        %s144 = scalar_lea.sflag [#allocation3], %s143
        %s145 = sand.u32 %s76, 1
        %s146 = smul.addr %s145, 8
        %s147 = scalar_lea.vmem [#allocation2], %s146
        %p148 = scmp.lt.s32.totalorder %s16, 2
        %s149 = scalar_select %p148, %s16, 2
        %s150 = smul.addr %s149, 8
        %s151 = scalar_lea.vmem %s0, %s150
        %p152 = scmp.lt.s32.totalorder %s16, 2
        %s153 = scalar_select %p152, %s16, 2
        %s154 = smul.addr %s153, 8
        %s155 = scalar_lea.vmem %s1, %s154
        %v156 = vld [vmem:[%s151] sm:$0xff]
        %v157 = vld [vmem:[%s155] sm:$0xff]
        %v158 = vlaneseq
        %v159 = vand.u32 %v158, 127
        %160 = vmax.xlane.f32.xlu0 %v156
        %v161 = vpop.xlane.xlu0 %160
        %v162 = vsub.f32 %v156, %v161
        %v163 = vmul.f32 %v162, 1.442695
        %v164 = vpow.pop %v163
        %165 = vadd.xlane.f32.xlu0 %v164
        %v166 = vpop.xlane.xlu0 %165
        %v167 = vlog2.pop %v166
        %v168 = vmul.f32 %v167, 0.6931472
        %v169 = vrcp.pop %v166
        %170 = vset.pattern.permute.xlu0 0
        %171 = vperm.xlu0 %170, %v157
        %v172 = vpop.permute.xlu0 %171
        %vm173 = vcmp.eq.s32.totalorder %v159, %v172
        %v174 = vsel %vm173, %v162, 0.0
        %175 = vadd.xlane.f32.xlu0 %v174
        %v176 = vpop.xlane.xlu0 %175
        %v177 = vsub.f32 %v168, %v176
        %v178 = vmul.f32 %v164, %v162
        %179 = vadd.xlane.f32.xlu0 %v178
        %v180 = vpop.xlane.xlu0 %179
        %v181 = vmul.f32 %v169, %v180
        %v182 = vsub.f32 %v168, %v181
        %vm183 = vcmask 7168
        %v184 = vsel %vm183, %v177, 0.0
        %185 = vadd.xlane.f32.xlu0 %v184
        %v186 = vpop.xlane.xlu0 %185
        %v187 = vrot.slane %v186, 4
        %v188 = vadd.f32 %v186, %v187
        %v189 = vrot.slane %v188, 2
        %v190 = vadd.f32 %v188, %v189
        %v191 = vrot.slane %v190, 1
        %v192 = vadd.f32 %v190, %v191
        %s193 = vtos %v192
        %v194 = vsel %vm183, %v169, 0.0
        %195 = vadd.xlane.f32.xlu0 %v194
        %v196 = vpop.xlane.xlu0 %195
        %v197 = vrot.slane %v196, 4
        %v198 = vadd.f32 %v196, %v197
        %v199 = vrot.slane %v198, 2
        %v200 = vadd.f32 %v198, %v199
        %v201 = vrot.slane %v200, 1
        %v202 = vadd.f32 %v200, %v201
        %s203 = vtos %v202
        %v204 = vsel %vm183, %v182, 0.0
        %205 = vadd.xlane.f32.xlu0 %v204
        %v206 = vpop.xlane.xlu0 %205
        %v207 = vrot.slane %v206, 4
        %v208 = vadd.f32 %v206, %v207
        %v209 = vrot.slane %v208, 2
        %v210 = vadd.f32 %v208, %v209
        %v211 = vrot.slane %v210, 1
        %v212 = vadd.f32 %v210, %v211
        %s213 = vtos %v212
        %vm214 = vcmp.eq.s32.totalorder %v159, 0
        %vm215 = vcmp.eq.s32.totalorder %v159, 1
        %vm216 = vcmp.eq.s32.totalorder %v159, 2
        %v217 = vstv %s213
        %v218 = vsel %vm216, %v217, 0.0
        %v219 = vstv %s203
        %v220 = vsel %vm215, %v219, %v218
        %v221 = vstv %s193
        %v222 = vsel %vm214, %v221, %v220
        %223 = vst [vmem:[%s147] sm:$0xff] %v222
        %s224 = sand.u32 %s76, 1
        %s225 = scalar_lea.sflag [#allocation3], %s224
        %s226 = sand.u32 %s76, 1
        %s227 = smul.addr %s226, 8
        %s228 = scalar_lea.vmem [#allocation2], %s227
        // Predicated region
        $region29: #{tpu_custom_call.1} parent=27 // pred_check
          %p229 = pneg %p86
        $region30: #{tpu_custom_call.1} parent=27 // pred_check_branch
          %231 = sbr.rel (%p229) target = $region32
        $region31: #{tpu_custom_call.1} parent=27 // pred_region
          %s233 = ssub.s32 128, 128
          %234 = vsyncadd %s225, %s233
          %s235 = smul.addr %s16, 128
          %s236 = scalar_lea.hbm %s2, %s235
          %s238 = sshll.u32 %s228, 4
          %s239 = int_to_ptr.vmem [resolvable:$true] %s238
          %241 = dma.vmem_to_hbm [thread:$0]  %s239, 128, %s236, %s225
        $region32: #{tpu_custom_call.1} parent=27 // pred_fallthru
          _
      $region28: #{tpu_custom_call.1} parent=5 // pred_fallthru
        _
      %p242 = scmp.le.s32.totalorder 2, %s11
      // Predicated region
      $region33: #{tpu_custom_call.1} parent=5 // pred_check
        %p243 = pneg %p242
      $region34: #{tpu_custom_call.1} parent=5 // pred_check_branch
        %245 = sbr.rel (%p243) target = $region36
      $region35: #{tpu_custom_call.1} parent=5 // pred_region
        %s246 = ssub.s32 %s11, 2
        // Predicated region
        $region37: #{tpu_custom_call.1} parent=35 // pred_check
          %p247 = pneg %p92
        $region38: #{tpu_custom_call.1} parent=35 // pred_check_branch
          %249 = sbr.rel (%p247) target = $region40
        $region39: #{tpu_custom_call.1} parent=35 // pred_region
          %s250 = sand.u32 %s77, 1
          %s251 = scalar_lea.sflag [#allocation3], %s250
          %s252 = sand.u32 %s77, 1
          %s253 = smul.addr %s252, 8
          %s254 = scalar_lea.vmem [#allocation2], %s253
          %255 = dma.done %s251, 128
        $region40: #{tpu_custom_call.1} parent=35 // pred_fallthru
          _
      $region36: #{tpu_custom_call.1} parent=5 // pred_fallthru
        _
    $region6: #{tpu_custom_call.1} parent=1 // loop_footer
      %s15 = sadd.s32 1, %s11
    $region7: #{tpu_custom_call.1} parent=1 // loop_footer_branch
      %10 = sbr.rel target = $region3
    $region8: #{tpu_custom_call.1} parent=1 // loop_exit
      _
    %256 = vsyncpa [#allocation3], 1
    %s257 = scalar_lea.sflag [#allocation3], 1
    %258 = vsyncpa %s257, 1

</llo_original>
